<compile_context>
chip_gen: v7x
topology: tpu7x:2x2x1
jax: 0.10.0
libtpu: 0.0.40
codegen_flags: <defaults>
</compile_context>

<pallas_src>
import functools
import math

import jax
import jax.numpy as jnp
from jax import lax
from jax.experimental import pallas as pl
from jax.experimental.pallas import tpu as pltpu

NEG_INF = -9e15  # matches torch's -9000000000000000.0 masking constant


# -----------------------------------------------------------------------------
# Kernel
# -----------------------------------------------------------------------------
def _gat_fused_kernel(x_ref, w_all_ref, a1_wide_ref, a2_selt_ref, tile_eye_ref,
                      expn_ref, adj_bias_wide_ref, sum_blk_ref, blkmask_ref,
                      adj_bias_ref, w_out_ref, a_o1_ref, a_o2_ref,
                      o_ref, *, alpha, n_heads):
    f32 = jnp.float32
    x = x_ref[...]                                                    # (N, F)

    # ---------------- layer 1: all H heads fused ----------------
    # Shared projection: one (N,F)x(F,H*O) matmul covers every head.
    h_all = jnp.dot(x, w_all_ref[...], preferred_element_type=f32)    # (N, H*O)

    # Batched attention projections (all heads at once):
    #   f1_wide[i, h*N+j] = <h_all[i, head h], a1[h]>  (already block-expanded)
    #   f2_t[h, j]        = <h_all[j, head h], a2[h]>  (transposed orientation,
    #                        a single A @ B^T contraction over features)
    f1_wide = jnp.dot(h_all, a1_wide_ref[...], preferred_element_type=f32)  # (N, H*N)
    f2_t = lax.dot_general(a2_selt_ref[...], h_all,
                           (((1,), (1,)), ((), ())),
                           preferred_element_type=f32)                # (H, N)
    # Pack f2 into one lane-major row (1, H*N): tile across lanes with a 0/1
    # constant, keep each head's own block, collapse heads (matmul + mask
    # instead of a lane-crossing reshape).
    f2_tile = jnp.dot(f2_t, tile_eye_ref[...], preferred_element_type=f32)  # (H, H*N)
    f2_row = jnp.sum(f2_tile * expn_ref[...], axis=0, keepdims=True)        # (1, H*N)

    # Lane-packed (N, H*N) logits slab: LeakyReLU / mask / softmax run ONCE.
    e = f1_wide + f2_row                                              # (N, H*N)
    e = jnp.where(e > 0, e, alpha * e)                                # LeakyReLU
    e = e + adj_bias_wide_ref[...]                                    # additive adj mask (hoisted)
    # Shared per-row max: constant inside each head's N-lane block, so every
    # head's softmax is unchanged; masked lanes sit at ~-9e15 and exp to 0.
    m = jnp.max(e, axis=1, keepdims=True)                             # (N, 1)
    p = jnp.exp(e - m)                                                # (N, H*N)
    denom = jnp.dot(p, sum_blk_ref[...], preferred_element_type=f32)  # per-head row sums
    att = p * pl.reciprocal(denom, approx=True)                       # (N, H*N)

    # All H (att_h @ h_h) products as ONE block-diagonal matmul; the (N, H*O)
    # head concat stays in vregs (no VMEM scratch round trip).
    h_blk = jnp.concatenate([h_all] * n_heads, axis=0) * blkmask_ref[...]   # (H*N, H*O)
    cat = jnp.dot(att, h_blk, preferred_element_type=f32)             # (N, H*O)

    # ELU (dropout is identity in eval mode); exp only sees non-positive args.
    xx = jnp.where(cat > 0, cat, jnp.exp(jnp.minimum(cat, 0.0)) - 1.0)

    # ---------------- output layer (lane-padded to 128) ----------------
    h2 = jnp.dot(xx, w_out_ref[...], preferred_element_type=f32)      # (N, 128); cols >= C are 0
    g1 = jnp.sum(h2 * a_o1_ref[...], axis=1, keepdims=True)           # (N, 1)
    g2_row = lax.dot_general(a_o2_ref[...], h2,
                             (((1,), (1,)), ((), ())),
                             preferred_element_type=f32)              # (1, N)
    e2 = g1 + g2_row                                                  # (N, N)
    e2 = jnp.where(e2 > 0, e2, alpha * e2)
    e2 = e2 + adj_bias_ref[...]
    m2 = jnp.max(e2, axis=1, keepdims=True)
    p2 = jnp.exp(e2 - m2)
    att2 = p2 * pl.reciprocal(jnp.sum(p2, axis=1, keepdims=True), approx=True)
    # Lane-dense unmasked (N, 128) store; real outputs live in the first C lanes.
    o_ref[...] = jnp.dot(att2, h2, preferred_element_type=f32)


# -----------------------------------------------------------------------------
# Wrapper
# -----------------------------------------------------------------------------
def graph_attention_network(nodes, adj, idx, params, alpha):
    """Eval-mode forward of GraphAttentionNetwork (single fused Pallas call)."""
    H, F, O = params["W_heads"].shape
    HO, C = params["W_out"].shape
    assert HO == H * O
    N = nodes.shape[0]
    HN = H * N
    P = 128                      # padded lane width for the final unmasked store

    f32 = jnp.float32
    eye_h = jnp.eye(H, dtype=f32)

    # ---- one-time constant re-layouts (plain JAX, outside the kernel) ----
    w_all = jnp.transpose(params["W_heads"], (1, 0, 2)).reshape(F, HO)        # (F, H*O)
    a_heads = params["a_heads"][..., 0]                                       # (H, 2*O)
    a1, a2 = a_heads[:, :O], a_heads[:, O:]

    a1_sel = (a1[:, :, None] * eye_h[:, None, :]).reshape(HO, H)              # (H*O, H)
    expn = jnp.repeat(eye_h, N, axis=1)                                       # (H, H*N)
    a1_wide = a1_sel @ expn                                                   # (H*O, H*N)
    a2_selt = (a2[:, None, :] * eye_h[:, :, None]).reshape(H, HO)             # (H, H*O)

    tile_eye = jnp.tile(jnp.eye(N, dtype=f32), (1, H))                        # (N, H*N)
    sum_blk = jnp.kron(eye_h, jnp.ones((N, N), f32))                          # (H*N, H*N)
    blkmask = jnp.kron(eye_h, jnp.ones((N, O), f32))                          # (H*N, H*O)

    adj_bias = jnp.where(adj > 0, 0.0, NEG_INF).astype(f32)                   # (N, N)
    adj_bias_wide = jnp.tile(adj_bias, (1, H))                                # (N, H*N)

    w_out_pad = jnp.zeros((HO, P), f32).at[:, :C].set(params["W_out"])        # (H*O, 128)
    a_out = params["a_out"][:, 0]
    a_o1 = jnp.zeros((1, P), f32).at[0, :C].set(a_out[:C])                    # (1, 128)
    a_o2 = jnp.zeros((1, P), f32).at[0, :C].set(a_out[C:])                    # (1, 128)

    flops = (2 * N * F * HO + 2 * N * HO * HN + 2 * H * HO * N + 2 * H * N * HN
             + 2 * N * HN * HN + 2 * N * HN * HO + 2 * N * HO * P + 2 * N * N * P
             + 30 * N * HN)
    cost = pl.CostEstimate(
        flops=flops,
        transcendentals=N * HN + N * N + N * HO + N * HN + N,
        bytes_accessed=4 * (N * F + F * HO + HO * HN + H * HO + N * HN + HN * HN
                            + HN * HO + N * HN + N * N + HO * P + 2 * P + N * P
                            + H * HN),
    )

    out = pl.pallas_call(
        functools.partial(_gat_fused_kernel, alpha=alpha, n_heads=H),
        out_shape=jax.ShapeDtypeStruct((N, P), f32),
        cost_estimate=cost,
        compiler_params=pltpu.CompilerParams(vmem_limit_bytes=32 * 1024 * 1024),
    )(nodes.astype(f32), w_all, a1_wide, a2_selt, tile_eye, expn,
      adj_bias_wide, sum_blk, blkmask, adj_bias, w_out_pad, a_o1, a_o2)

    # TODO(synk): dropout layers are identity in eval mode and therefore omitted.
    # TODO(synk): for batched graphs / large N (esp. v7x's 64 MiB VMEM, 2 TCs),
    # add a leading "parallel" grid axis over graphs and row-tile adj with an
    # online softmax; a single tiny graph is best served by this grid-less call.
    return out[:, :C][idx]   # lane-padding slice + final x[idx] gather in plain JAX


# -----------------------------------------------------------------------------
# Deterministic parameter init (xavier_uniform_, gain=1.414) + pure-JAX reference
# -----------------------------------------------------------------------------
def _xavier_uniform(key, shape, gain=1.414):
    fan_in, fan_out = shape[-2], shape[-1]
    bound = gain * math.sqrt(6.0 / (fan_in + fan_out))
    return jax.random.uniform(key, shape, jnp.float32, -bound, bound)


def _ref_layer(x, adj, W, a, alpha):
    h = jnp.dot(x, W, precision=jax.lax.Precision.HIGHEST)
    O = W.shape[1]
    f1 = jnp.dot(h, a[:O], precision=jax.lax.Precision.HIGHEST)
    f2 = jnp.dot(h, a[O:], precision=jax.lax.Precision.HIGHEST)
    e = f1 + f2.T
    e = jnp.where(e > 0, e, alpha * e)
    att = jnp.where(adj > 0, e, jnp.full_like(e, NEG_INF))
    att = jax.nn.softmax(att, axis=1)
    return jnp.dot(att, h, precision=jax.lax.Precision.HIGHEST)


def _ref_network(nodes, adj, idx, params, alpha):
    heads = [_ref_layer(nodes, adj, params["W_heads"][h], params["a_heads"][h], alpha)
             for h in range(params["W_heads"].shape[0])]
    x = jnp.concatenate(heads, axis=1)
    x = jnp.where(x > 0, x, jnp.exp(x) - 1.0)
    x = _ref_layer(x, adj, params["W_out"], params["a_out"], alpha)
    return x[idx]


# -----------------------------------------------------------------------------
if __name__ == "__main__":
    N, n_feat, n_hid, n_class, n_heads = 16, 16, 8, 8, 4
    alpha = 0.2  # LeakyReLU negative slope

    key = jax.random.PRNGKey(0)
    k_nodes, k_adj, k_idx, k_wh, k_ah, k_wo, k_ao = jax.random.split(key, 7)

    nodes = jax.random.normal(k_nodes, (N, n_feat), jnp.float32)
    adj = (jax.random.uniform(k_adj, (N, N)) > 0.6).astype(jnp.float32)
    adj = jnp.maximum(adj, jnp.eye(N, dtype=jnp.float32))   # self-loops
    idx = jax.random.permutation(k_idx, N)

    params = {
        "W_heads": _xavier_uniform(k_wh, (n_heads, n_feat, n_hid)),
        "a_heads": _xavier_uniform(k_ah, (n_heads, 2 * n_hid, 1)),
        "W_out": _xavier_uniform(k_wo, (n_hid * n_heads, n_class)),
        "a_out": _xavier_uniform(k_ao, (2 * n_class, 1)),
    }

    out = graph_attention_network(nodes, adj, idx, params, alpha)
    out = jax.block_until_ready(out)

    ref = jax.block_until_ready(_ref_network(nodes, adj, idx, params, alpha))
    assert out.shape == (N, n_class)
    assert jnp.all(jnp.isfinite(out))
    # Tolerance accounts for the approximate EUP reciprocal in the softmax
    # (deliberate eval-mode divergence: attention rows sum to ~1 +- 1e-3).
    assert jnp.allclose(out, ref, rtol=1e-2, atol=1e-2), "mismatch vs JAX reference"

    print("KERNEL_OK")
</pallas_src>

<mosaic_0001>
module attributes {stable_mosaic.version = 11 : i64} {
  func.func @_gat_fused_kernel(%arg0: memref<16x16xf32, #tpu.memory_space<vmem>>, %arg1: memref<16x32xf32, #tpu.memory_space<vmem>>, %arg2: memref<32x64xf32, #tpu.memory_space<vmem>>, %arg3: memref<4x32xf32, #tpu.memory_space<vmem>>, %arg4: memref<16x64xf32, #tpu.memory_space<vmem>>, %arg5: memref<4x64xf32, #tpu.memory_space<vmem>>, %arg6: memref<16x64xf32, #tpu.memory_space<vmem>>, %arg7: memref<64x64xf32, #tpu.memory_space<vmem>>, %arg8: memref<64x32xf32, #tpu.memory_space<vmem>>, %arg9: memref<16x16xf32, #tpu.memory_space<vmem>>, %arg10: memref<32x128xf32, #tpu.memory_space<vmem>>, %arg11: memref<1x128xf32, #tpu.memory_space<vmem>>, %arg12: memref<1x128xf32, #tpu.memory_space<vmem>>, %arg13: memref<16x128xf32, #tpu.memory_space<vmem>>) attributes {dimension_semantics = [], scalar_prefetch = 0 : i64, scratch_operands = 0 : i64, tpu.core_type = #tpu.core_type<tc>} {
    %c0 = arith.constant 0 : index
    %c0_0 = arith.constant 0 : index
    %0 = vector.load %arg0[%c0, %c0_0] : memref<16x16xf32, #tpu.memory_space<vmem>>, vector<16x16xf32>
    %c0_1 = arith.constant 0 : index
    %c0_2 = arith.constant 0 : index
    %1 = vector.load %arg1[%c0_1, %c0_2] : memref<16x32xf32, #tpu.memory_space<vmem>>, vector<16x32xf32>
    %cst = arith.constant dense<0.000000e+00> : vector<16x32xf32>
    %2 = tpu.matmul %0, %1, %cst {dimension_numbers = #tpu.dot_dimension_numbers<[1], [0], [0], [1], [0, 0, 1, 1], [], []>} : vector<16x16xf32>, vector<16x32xf32>, vector<16x32xf32> -> vector<16x32xf32>
    %c0_3 = arith.constant 0 : index
    %c0_4 = arith.constant 0 : index
    %3 = vector.load %arg2[%c0_3, %c0_4] : memref<32x64xf32, #tpu.memory_space<vmem>>, vector<32x64xf32>
    %cst_5 = arith.constant dense<0.000000e+00> : vector<16x64xf32>
    %4 = tpu.matmul %2, %3, %cst_5 {dimension_numbers = #tpu.dot_dimension_numbers<[1], [0], [0], [1], [0, 0, 1, 1], [], []>} : vector<16x32xf32>, vector<32x64xf32>, vector<16x64xf32> -> vector<16x64xf32>
    %c0_6 = arith.constant 0 : index
    %c0_7 = arith.constant 0 : index
    %5 = vector.load %arg3[%c0_6, %c0_7] : memref<4x32xf32, #tpu.memory_space<vmem>>, vector<4x32xf32>
    %cst_8 = arith.constant dense<0.000000e+00> : vector<4x16xf32>
    %6 = tpu.matmul %5, %2, %cst_8 {dimension_numbers = #tpu.dot_dimension_numbers<[1], [1], [0], [0], [0, 0, 1, 0], [], []>} : vector<4x32xf32>, vector<16x32xf32>, vector<4x16xf32> -> vector<4x16xf32>
    %c0_9 = arith.constant 0 : index
    %c0_10 = arith.constant 0 : index
    %7 = vector.load %arg4[%c0_9, %c0_10] : memref<16x64xf32, #tpu.memory_space<vmem>>, vector<16x64xf32>
    %cst_11 = arith.constant dense<0.000000e+00> : vector<4x64xf32>
    %8 = tpu.matmul %6, %7, %cst_11 {dimension_numbers = #tpu.dot_dimension_numbers<[1], [0], [0], [1], [0, 0, 1, 1], [], []>} : vector<4x16xf32>, vector<16x64xf32>, vector<4x64xf32> -> vector<4x64xf32>
    %c0_12 = arith.constant 0 : index
    %c0_13 = arith.constant 0 : index
    %9 = vector.load %arg5[%c0_12, %c0_13] : memref<4x64xf32, #tpu.memory_space<vmem>>, vector<4x64xf32>
    %10 = arith.mulf %8, %9 : vector<4x64xf32>
    %cst_14 = arith.constant dense<0.000000e+00> : vector<64xf32>
    %11 = vector.multi_reduction <add>, %10, %cst_14 [0] : vector<4x64xf32> to vector<64xf32>
    %12 = vector.shape_cast %11 : vector<64xf32> to vector<1x64xf32>
    %13 = vector.broadcast %12 : vector<1x64xf32> to vector<16x64xf32>
    %14 = arith.addf %4, %13 : vector<16x64xf32>
    %cst_15 = arith.constant 0.000000e+00 : f32
    %15 = vector.broadcast %cst_15 : f32 to vector<16x64xf32>
    %16 = arith.cmpf ogt, %14, %15 : vector<16x64xf32>
    %cst_16 = arith.constant 2.000000e-01 : f32
    %17 = vector.broadcast %cst_16 : f32 to vector<16x64xf32>
    %18 = arith.mulf %17, %14 : vector<16x64xf32>
    %19 = arith.select %16, %14, %18 : vector<16x64xi1>, vector<16x64xf32>
    %c0_17 = arith.constant 0 : index
    %c0_18 = arith.constant 0 : index
    %20 = vector.load %arg6[%c0_17, %c0_18] : memref<16x64xf32, #tpu.memory_space<vmem>>, vector<16x64xf32>
    %21 = arith.addf %19, %20 : vector<16x64xf32>
    %cst_19 = arith.constant dense<0xFF800000> : vector<16xf32>
    %22 = vector.multi_reduction <maximumf>, %21, %cst_19 [1] : vector<16x64xf32> to vector<16xf32>
    %23 = vector.shape_cast %22 : vector<16xf32> to vector<16x1xf32>
    %24 = vector.broadcast %23 : vector<16x1xf32> to vector<16x64xf32>
    %25 = arith.subf %21, %24 : vector<16x64xf32>
    %26 = math.exp %25 : vector<16x64xf32>
    %c0_20 = arith.constant 0 : index
    %c0_21 = arith.constant 0 : index
    %27 = vector.load %arg7[%c0_20, %c0_21] : memref<64x64xf32, #tpu.memory_space<vmem>>, vector<64x64xf32>
    %cst_22 = arith.constant dense<0.000000e+00> : vector<16x64xf32>
    %28 = tpu.matmul %26, %27, %cst_22 {dimension_numbers = #tpu.dot_dimension_numbers<[1], [0], [0], [1], [0, 0, 1, 1], [], []>} : vector<16x64xf32>, vector<64x64xf32>, vector<16x64xf32> -> vector<16x64xf32>
    %29 = tpu.reciprocal %28 {approx = true} : vector<16x64xf32> -> vector<16x64xf32>
    %30 = arith.mulf %26, %29 : vector<16x64xf32>
    %31 = tpu.concatenate %2, %2, %2, %2 in 0 : vector<16x32xf32>, vector<16x32xf32>, vector<16x32xf32>, vector<16x32xf32> -> vector<64x32xf32>
    %c0_23 = arith.constant 0 : index
    %c0_24 = arith.constant 0 : index
    %32 = vector.load %arg8[%c0_23, %c0_24] : memref<64x32xf32, #tpu.memory_space<vmem>>, vector<64x32xf32>
    %33 = arith.mulf %31, %32 : vector<64x32xf32>
    %cst_25 = arith.constant dense<0.000000e+00> : vector<16x32xf32>
    %34 = tpu.matmul %30, %33, %cst_25 {dimension_numbers = #tpu.dot_dimension_numbers<[1], [0], [0], [1], [0, 0, 1, 1], [], []>} : vector<16x64xf32>, vector<64x32xf32>, vector<16x32xf32> -> vector<16x32xf32>
    %cst_26 = arith.constant 0.000000e+00 : f32
    %35 = vector.broadcast %cst_26 : f32 to vector<16x32xf32>
    %36 = arith.cmpf ogt, %34, %35 : vector<16x32xf32>
    %cst_27 = arith.constant 0.000000e+00 : f32
    %37 = vector.broadcast %cst_27 : f32 to vector<16x32xf32>
    %38 = arith.minimumf %34, %37 : vector<16x32xf32>
    %39 = math.exp %38 : vector<16x32xf32>
    %cst_28 = arith.constant 1.000000e+00 : f32
    %40 = vector.broadcast %cst_28 : f32 to vector<16x32xf32>
    %41 = arith.subf %39, %40 : vector<16x32xf32>
    %42 = arith.select %36, %34, %41 : vector<16x32xi1>, vector<16x32xf32>
    %c0_29 = arith.constant 0 : index
    %c0_30 = arith.constant 0 : index
    %43 = vector.load %arg10[%c0_29, %c0_30] : memref<32x128xf32, #tpu.memory_space<vmem>>, vector<32x128xf32>
    %cst_31 = arith.constant dense<0.000000e+00> : vector<16x128xf32>
    %44 = tpu.matmul %42, %43, %cst_31 {dimension_numbers = #tpu.dot_dimension_numbers<[1], [0], [0], [1], [0, 0, 1, 1], [], []>} : vector<16x32xf32>, vector<32x128xf32>, vector<16x128xf32> -> vector<16x128xf32>
    %c0_32 = arith.constant 0 : index
    %c0_33 = arith.constant 0 : index
    %45 = vector.load %arg11[%c0_32, %c0_33] : memref<1x128xf32, #tpu.memory_space<vmem>>, vector<1x128xf32>
    %46 = vector.broadcast %45 : vector<1x128xf32> to vector<16x128xf32>
    %47 = arith.mulf %44, %46 : vector<16x128xf32>
    %cst_34 = arith.constant dense<0.000000e+00> : vector<16xf32>
    %48 = vector.multi_reduction <add>, %47, %cst_34 [1] : vector<16x128xf32> to vector<16xf32>
    %49 = vector.shape_cast %48 : vector<16xf32> to vector<16x1xf32>
    %c0_35 = arith.constant 0 : index
    %c0_36 = arith.constant 0 : index
    %50 = vector.load %arg12[%c0_35, %c0_36] : memref<1x128xf32, #tpu.memory_space<vmem>>, vector<1x128xf32>
    %cst_37 = arith.constant dense<0.000000e+00> : vector<1x16xf32>
    %51 = tpu.matmul %50, %44, %cst_37 {dimension_numbers = #tpu.dot_dimension_numbers<[1], [1], [0], [0], [0, 0, 1, 0], [], []>} : vector<1x128xf32>, vector<16x128xf32>, vector<1x16xf32> -> vector<1x16xf32>
    %52 = vector.broadcast %49 : vector<16x1xf32> to vector<16x16xf32>
    %53 = vector.broadcast %51 : vector<1x16xf32> to vector<16x16xf32>
    %54 = arith.addf %52, %53 : vector<16x16xf32>
    %cst_38 = arith.constant 0.000000e+00 : f32
    %55 = vector.broadcast %cst_38 : f32 to vector<16x16xf32>
    %56 = arith.cmpf ogt, %54, %55 : vector<16x16xf32>
    %cst_39 = arith.constant 2.000000e-01 : f32
    %57 = vector.broadcast %cst_39 : f32 to vector<16x16xf32>
    %58 = arith.mulf %57, %54 : vector<16x16xf32>
    %59 = arith.select %56, %54, %58 : vector<16x16xi1>, vector<16x16xf32>
    %c0_40 = arith.constant 0 : index
    %c0_41 = arith.constant 0 : index
    %60 = vector.load %arg9[%c0_40, %c0_41] : memref<16x16xf32, #tpu.memory_space<vmem>>, vector<16x16xf32>
    %61 = arith.addf %59, %60 : vector<16x16xf32>
    %cst_42 = arith.constant dense<0xFF800000> : vector<16xf32>
    %62 = vector.multi_reduction <maximumf>, %61, %cst_42 [1] : vector<16x16xf32> to vector<16xf32>
    %63 = vector.shape_cast %62 : vector<16xf32> to vector<16x1xf32>
    %64 = vector.broadcast %63 : vector<16x1xf32> to vector<16x16xf32>
    %65 = arith.subf %61, %64 : vector<16x16xf32>
    %66 = math.exp %65 : vector<16x16xf32>
    %cst_43 = arith.constant dense<0.000000e+00> : vector<16xf32>
    %67 = vector.multi_reduction <add>, %66, %cst_43 [1] : vector<16x16xf32> to vector<16xf32>
    %68 = vector.shape_cast %67 : vector<16xf32> to vector<16x1xf32>
    %69 = tpu.reciprocal %68 {approx = true} : vector<16x1xf32> -> vector<16x1xf32>
    %70 = vector.broadcast %69 : vector<16x1xf32> to vector<16x16xf32>
    %71 = arith.mulf %66, %70 : vector<16x16xf32>
    %cst_44 = arith.constant dense<0.000000e+00> : vector<16x128xf32>
    %72 = tpu.matmul %71, %44, %cst_44 {dimension_numbers = #tpu.dot_dimension_numbers<[1], [0], [0], [1], [0, 0, 1, 1], [], []>} : vector<16x16xf32>, vector<16x128xf32>, vector<16x128xf32> -> vector<16x128xf32>
    %c0_45 = arith.constant 0 : index
    %c0_46 = arith.constant 0 : index
    %73 = vector.load %arg13[%c0_45, %c0_46] : memref<16x128xf32, #tpu.memory_space<vmem>>, vector<16x128xf32>
    tpu.vector_store %arg13[%c0_45, %c0_46], %72 {strides = array<i32>} : memref<16x128xf32, #tpu.memory_space<vmem>>, vector<16x128xf32>,
    return
  }
}

</mosaic_0001>

<llo_original>
// kernel: tpu_custom_call.1
$region0: #{tpu_custom_call.1}
  #allocation0 [shape = 'u32[]', space=smem, size = 0x4, offset = 0x4, fixed_abs, tag = 'smem constant byte address 0x4 - core index']
  #allocation1 [shape = 'u32[144,128]{1,0:T(1,128)}', space=vmem, size = 0x12000, scoped, tag = 'internal scratch']
  %s0 = inlined_call_operand.hbm [shape: f32[16,16], index: 0, kind: input, shape index: {}]
  %s1 = inlined_call_operand.hbm [shape: f32[16,32], index: 1, kind: input, shape index: {}]
  %s2 = inlined_call_operand.vmem [shape: f32[32,64], index: 2, kind: input, shape index: {}]
  %s3 = inlined_call_operand.hbm [shape: f32[4,32], index: 3, kind: input, shape index: {}]
  %s4 = inlined_call_operand.hbm [shape: f32[16,64], index: 4, kind: input, shape index: {}]
  %s5 = inlined_call_operand.hbm [shape: f32[4,64], index: 5, kind: input, shape index: {}]
  %s6 = inlined_call_operand.hbm [shape: f32[16,64], index: 6, kind: input, shape index: {}]
  %s7 = inlined_call_operand.vmem [shape: f32[64,64], index: 7, kind: input, shape index: {}]
  %s8 = inlined_call_operand.vmem [shape: f32[64,32], index: 8, kind: input, shape index: {}]
  %s9 = inlined_call_operand.hbm [shape: f32[16,16], index: 9, kind: input, shape index: {}]
  %s10 = inlined_call_operand.vmem [shape: f32[32,128], index: 10, kind: input, shape index: {}]
  %s11 = inlined_call_operand.vmem [shape: f32[1,128], index: 11, kind: input, shape index: {}]
  %s12 = inlined_call_operand.vmem [shape: f32[1,128], index: 12, kind: input, shape index: {}]
  %s13 = inlined_call_operand.hbm [shape: f32[16,128], index: 13, kind: output, shape index: {}]
  %s14 = sld [smem:[#allocation0]]
  $region90: #{tpu_custom_call.1} parent=0
    _
  %s16 = ssub.s32 1, %s14
  %s17 = scalar_select 0, %s16, %s14
  $region1: #{tpu_custom_call.1} parent=0
    #allocation2 [shape = 'u8[8192]{0}', space=vmem, size = 0x2000, scoped, tag = 'input window, operand 0, single buffered']
    #allocation3 [shape = 's32[1]{0}', space=sflag, size = 0x4, scoped, tag = 'scoped memory for tpu_custom_call.1']
    #allocation4 [shape = 's32[1]{0}', space=sflag, size = 0x4, scoped, tag = 'scoped memory for tpu_custom_call.1']
    #allocation5 [shape = 'u8[8192]{0}', space=vmem, size = 0x2000, scoped, tag = 'input window, operand 1, single buffered']
    #allocation6 [shape = 's32[1]{0}', space=sflag, size = 0x4, scoped, tag = 'scoped memory for tpu_custom_call.1']
    #allocation7 [shape = 'u8[2048]{0}', space=vmem, size = 0x800, scoped, tag = 'input window, operand 3, single buffered']
    #allocation8 [shape = 'u8[8192]{0}', space=vmem, size = 0x2000, scoped, tag = 'input window, operand 4, single buffered']
    #allocation9 [shape = 's32[1]{0}', space=sflag, size = 0x4, scoped, tag = 'scoped memory for tpu_custom_call.1']
    #allocation10 [shape = 'u8[2048]{0}', space=vmem, size = 0x800, scoped, tag = 'input window, operand 5, single buffered']
    #allocation11 [shape = 'u8[8192]{0}', space=vmem, size = 0x2000, scoped, tag = 'input window, operand 6, single buffered']
    #allocation12 [shape = 's32[1]{0}', space=sflag, size = 0x4, scoped, tag = 'scoped memory for tpu_custom_call.1']
    #allocation13 [shape = 'u8[8192]{0}', space=vmem, size = 0x2000, scoped, tag = 'input window, operand 9, single buffered']
    #allocation14 [shape = 'u8[8192]{0}', space=vmem, size = 0x2000, scoped, tag = 'output window, operand 0, single buffered']
    %18 = vsyncpa [#allocation3], 0
    %19 = vsyncpa [#allocation6], 0
    %20 = vsyncpa [#allocation9], 0
    %21 = vsyncpa [#allocation12], 0
    %22 = vsyncpa [#allocation4], 0
    // Predicated region
    $region2: #{tpu_custom_call.1} parent=1 // pred_check
      _
    $region3: #{tpu_custom_call.1} parent=1 // pred_check_branch
      %24 = sbr.rel (0) target = $region5
    $region4: #{tpu_custom_call.1} parent=1 // pred_region
      %s26 = ssub.s32 256, 256
      %27 = vsyncadd [#allocation3], %s26
      %s28 = sshll.u32 [#allocation2], 4
      %s29 = int_to_ptr.vmem [resolvable:$true] %s28
      %34 = dma.hbm_to_vmem [thread:$0]  %s0, 256, %s29, [#allocation3], 128, 128, 8
    $region5: #{tpu_custom_call.1} parent=1 // pred_fallthru
      _
    // Predicated region
    $region6: #{tpu_custom_call.1} parent=1 // pred_check
      _
    $region7: #{tpu_custom_call.1} parent=1 // pred_check_branch
      %36 = sbr.rel (0) target = $region9
    $region8: #{tpu_custom_call.1} parent=1 // pred_region
      %s38 = ssub.s32 256, 256
      %39 = vsyncadd [#allocation6], %s38
      %s40 = sshll.u32 [#allocation5], 4
      %s41 = int_to_ptr.vmem [resolvable:$true] %s40
      %46 = dma.hbm_to_vmem [thread:$0]  %s1, 256, %s41, [#allocation6], 128, 128, 8
    $region9: #{tpu_custom_call.1} parent=1 // pred_fallthru
      _
    // Predicated region
    $region10: #{tpu_custom_call.1} parent=1 // pred_check
      _
    $region11: #{tpu_custom_call.1} parent=1 // pred_check_branch
      %48 = sbr.rel (0) target = $region13
    $region12: #{tpu_custom_call.1} parent=1 // pred_region
      _
    $region13: #{tpu_custom_call.1} parent=1 // pred_fallthru
      _
    // Predicated region
    $region14: #{tpu_custom_call.1} parent=1 // pred_check
      _
    $region15: #{tpu_custom_call.1} parent=1 // pred_check_branch
      %50 = sbr.rel (0) target = $region17
    $region16: #{tpu_custom_call.1} parent=1 // pred_region
      %s52 = ssub.s32 64, 64
      %53 = vsyncadd [#allocation6], %s52
      %s55 = sshll.u32 [#allocation7], 4
      %s56 = int_to_ptr.vmem [resolvable:$true] %s55
      %58 = dma.hbm_to_vmem [thread:$0]  %s3, 64, %s56, [#allocation6]
    $region17: #{tpu_custom_call.1} parent=1 // pred_fallthru
      _
    // Predicated region
    $region18: #{tpu_custom_call.1} parent=1 // pred_check
      _
    $region19: #{tpu_custom_call.1} parent=1 // pred_check_branch
      %60 = sbr.rel (0) target = $region21
    $region20: #{tpu_custom_call.1} parent=1 // pred_region
      %s62 = ssub.s32 256, 256
      %63 = vsyncadd [#allocation9], %s62
      %s64 = sshll.u32 [#allocation8], 4
      %s65 = int_to_ptr.vmem [resolvable:$true] %s64
      %70 = dma.hbm_to_vmem [thread:$0]  %s4, 256, %s65, [#allocation9], 128, 128, 8
    $region21: #{tpu_custom_call.1} parent=1 // pred_fallthru
      _
    // Predicated region
    $region22: #{tpu_custom_call.1} parent=1 // pred_check
      _
    $region23: #{tpu_custom_call.1} parent=1 // pred_check_branch
      %72 = sbr.rel (0) target = $region25
    $region24: #{tpu_custom_call.1} parent=1 // pred_region
      %s74 = ssub.s32 64, 64
      %75 = vsyncadd [#allocation9], %s74
      %s77 = sshll.u32 [#allocation10], 4
      %s78 = int_to_ptr.vmem [resolvable:$true] %s77
      %80 = dma.hbm_to_vmem [thread:$0]  %s5, 64, %s78, [#allocation9]
    $region25: #{tpu_custom_call.1} parent=1 // pred_fallthru
      _
    // Predicated region
    $region26: #{tpu_custom_call.1} parent=1 // pred_check
      _
    $region27: #{tpu_custom_call.1} parent=1 // pred_check_branch
      %82 = sbr.rel (0) target = $region29
    $region28: #{tpu_custom_call.1} parent=1 // pred_region
      %s84 = ssub.s32 256, 256
      %85 = vsyncadd [#allocation12], %s84
      %s86 = sshll.u32 [#allocation11], 4
      %s87 = int_to_ptr.vmem [resolvable:$true] %s86
      %92 = dma.hbm_to_vmem [thread:$0]  %s6, 256, %s87, [#allocation12], 128, 128, 8
    $region29: #{tpu_custom_call.1} parent=1 // pred_fallthru
      _
    // Predicated region
    $region30: #{tpu_custom_call.1} parent=1 // pred_check
      _
    $region31: #{tpu_custom_call.1} parent=1 // pred_check_branch
      %94 = sbr.rel (0) target = $region33
    $region32: #{tpu_custom_call.1} parent=1 // pred_region
      _
    $region33: #{tpu_custom_call.1} parent=1 // pred_fallthru
      _
    // Predicated region
    $region34: #{tpu_custom_call.1} parent=1 // pred_check
      _
    $region35: #{tpu_custom_call.1} parent=1 // pred_check_branch
      %96 = sbr.rel (0) target = $region37
    $region36: #{tpu_custom_call.1} parent=1 // pred_region
      _
    $region37: #{tpu_custom_call.1} parent=1 // pred_fallthru
      _
    // Predicated region
    $region38: #{tpu_custom_call.1} parent=1 // pred_check
      _
    $region39: #{tpu_custom_call.1} parent=1 // pred_check_branch
      %98 = sbr.rel (0) target = $region41
    $region40: #{tpu_custom_call.1} parent=1 // pred_region
      %s100 = ssub.s32 256, 256
      %101 = vsyncadd [#allocation12], %s100
      %s102 = sshll.u32 [#allocation13], 4
      %s103 = int_to_ptr.vmem [resolvable:$true] %s102
      %108 = dma.hbm_to_vmem [thread:$0]  %s9, 256, %s103, [#allocation12], 128, 128, 8
    $region41: #{tpu_custom_call.1} parent=1 // pred_fallthru
      _
    // Predicated region
    $region42: #{tpu_custom_call.1} parent=1 // pred_check
      _
    $region43: #{tpu_custom_call.1} parent=1 // pred_check_branch
      %110 = sbr.rel (0) target = $region45
    $region44: #{tpu_custom_call.1} parent=1 // pred_region
      _
    $region45: #{tpu_custom_call.1} parent=1 // pred_fallthru
      _
    // Predicated region
    $region46: #{tpu_custom_call.1} parent=1 // pred_check
      _
    $region47: #{tpu_custom_call.1} parent=1 // pred_check_branch
      %112 = sbr.rel (0) target = $region49
    $region48: #{tpu_custom_call.1} parent=1 // pred_region
      _
    $region49: #{tpu_custom_call.1} parent=1 // pred_fallthru
      _
    // Predicated region
    $region50: #{tpu_custom_call.1} parent=1 // pred_check
      _
    $region51: #{tpu_custom_call.1} parent=1 // pred_check_branch
      %114 = sbr.rel (0) target = $region53
    $region52: #{tpu_custom_call.1} parent=1 // pred_region
      _
    $region53: #{tpu_custom_call.1} parent=1 // pred_fallthru
      _
    // Predicated region
    $region54: #{tpu_custom_call.1} parent=1 // pred_check
      _
    $region55: #{tpu_custom_call.1} parent=1 // pred_check_branch
      %116 = sbr.rel (0) target = $region57
    $region56: #{tpu_custom_call.1} parent=1 // pred_region
      %117 = dma.done [#allocation3], 256
    $region57: #{tpu_custom_call.1} parent=1 // pred_fallthru
      _
    // Predicated region
    $region58: #{tpu_custom_call.1} parent=1 // pred_check
      _
    $region59: #{tpu_custom_call.1} parent=1 // pred_check_branch
      %119 = sbr.rel (0) target = $region61
    $region60: #{tpu_custom_call.1} parent=1 // pred_region
      %120 = dma.done [#allocation6], 256
    $region61: #{tpu_custom_call.1} parent=1 // pred_fallthru
      _
    // Predicated region
    $region62: #{tpu_custom_call.1} parent=1 // pred_check
      _
    $region63: #{tpu_custom_call.1} parent=1 // pred_check_branch
      %122 = sbr.rel (0) target = $region65
    $region64: #{tpu_custom_call.1} parent=1 // pred_region
      %123 = dma.done [#allocation6], 64
    $region65: #{tpu_custom_call.1} parent=1 // pred_fallthru
      _
    // Predicated region
    $region66: #{tpu_custom_call.1} parent=1 // pred_check
      _
    $region67: #{tpu_custom_call.1} parent=1 // pred_check_branch
      %125 = sbr.rel (0) target = $region69
    $region68: #{tpu_custom_call.1} parent=1 // pred_region
      %126 = dma.done [#allocation9], 256
    $region69: #{tpu_custom_call.1} parent=1 // pred_fallthru
      _
    // Predicated region
    $region70: #{tpu_custom_call.1} parent=1 // pred_check
      _
    $region71: #{tpu_custom_call.1} parent=1 // pred_check_branch
      %128 = sbr.rel (0) target = $region73
    $region72: #{tpu_custom_call.1} parent=1 // pred_region
      %129 = dma.done [#allocation9], 64
    $region73: #{tpu_custom_call.1} parent=1 // pred_fallthru
      _
    // Predicated region
    $region74: #{tpu_custom_call.1} parent=1 // pred_check
      _
    $region75: #{tpu_custom_call.1} parent=1 // pred_check_branch
      %131 = sbr.rel (0) target = $region77
    $region76: #{tpu_custom_call.1} parent=1 // pred_region
      %132 = dma.done [#allocation12], 256
    $region77: #{tpu_custom_call.1} parent=1 // pred_fallthru
      _
    // Predicated region
    $region78: #{tpu_custom_call.1} parent=1 // pred_check
      _
    $region79: #{tpu_custom_call.1} parent=1 // pred_check_branch
      %134 = sbr.rel (0) target = $region81
    $region80: #{tpu_custom_call.1} parent=1 // pred_region
      %135 = dma.done [#allocation12], 256
    $region81: #{tpu_custom_call.1} parent=1 // pred_fallthru
      _
    %v136 = vld [vmem:[#allocation2] sm:$0xff]
    %v137 = vld [vmem:[#allocation2 + $0x8] sm:$0xff]
    %v138 = vld [vmem:[#allocation5] sm:$0xff]
    %v139 = vld [vmem:[#allocation5 + $0x8] sm:$0xff]
    %vm140 = vcmask 130048
    %v142 = vsel %vm140, %v136, 0
    %v145 = vsel %vm140, %v137, 0
    %147 = vmatprep.subr.mxu0 0.0
    %148 = vmatpush1.msra.mxu0 %v138
    %149 = vmatprep.subr.mxu0 0.0
    %150 = vmatpush1.msra.mxu0 %v139
    %151 = vmatprep.subr.mxu0 0.0
    %152 = vmatpush1.msra.mxu0 0.0
    %153 = vmatprep.subr.mxu0 0.0
    %154 = vmatpush1.msra.mxu0 0.0
    %155 = vmatprep.subr.mxu0 0.0
    %156 = vmatpush1.msra.mxu0 0.0
    %157 = vmatprep.subr.mxu0 0.0
    %158 = vmatpush1.msra.mxu0 0.0
    %159 = vmatprep.subr.mxu0 0.0
    %160 = vmatpush1.msra.mxu0 0.0
    %161 = vmatprep.subr.mxu0 0.0
    %162 = vmatpush1.msra.mxu0 0.0
    %163 = vmatprep.subr.mxu0 0.0
    %164 = vmatpush1.msra.mxu0 0.0
    %165 = vmatprep.subr.mxu0 0.0
    %166 = vmatpush1.msra.mxu0 0.0
    %167 = vmatprep.subr.mxu0 0.0
    %168 = vmatpush1.msra.mxu0 0.0
    %169 = vmatprep.subr.mxu0 0.0
    %170 = vmatpush1.msra.mxu0 0.0
    %171 = vmatprep.subr.mxu0 0.0
    %172 = vmatpush1.msra.mxu0 0.0
    %173 = vmatprep.subr.mxu0 0.0
    %174 = vmatpush1.msra.mxu0 0.0
    %175 = vmatprep.subr.mxu0 0.0
    %176 = vmatpush1.msra.mxu0 0.0
    %177 = vmatprep.subr.mxu0 0.0
    %178 = vmatpush1.msra.mxu0 0.0
    %179 = vmatprep.subr.mxu0 0.0
    %180 = vmatpush1.msra.mxu0 0.0
    %181 = vmatprep.subr.mxu0 0.0
    %182 = vmatpush1.msra.mxu0 0.0
    %183 = vmatprep.subr.mxu0 0.0
    %184 = vmatpush1.msra.mxu0 0.0
    %185 = vmatprep.subr.mxu0 0.0
    %186 = vmatpush1.msra.mxu0 0.0
    %187 = vmatprep.subr.mxu0 0.0
    %188 = vmatpush1.msra.mxu0 0.0
    %189 = vmatprep.subr.mxu0 0.0
    %190 = vmatpush1.msra.mxu0 0.0
    %191 = vmatprep.subr.mxu0 0.0
    %192 = vmatpush1.msra.mxu0 0.0
    %193 = vmatprep.subr.mxu0 0.0
    %194 = vmatpush1.msra.mxu0 0.0
    %195 = vmatprep.subr.mxu0 0.0
    %196 = vmatpush1.msra.mxu0 0.0
    %197 = vmatprep.subr.mxu0 0.0
    %198 = vmatpush1.msra.mxu0 0.0
    %199 = vmatprep.subr.mxu0 0.0
    %200 = vmatpush1.msra.mxu0 0.0
    %201 = vmatprep.subr.mxu0 0.0
    %202 = vmatpush1.msra.mxu0 0.0
    %203 = vmatprep.subr.mxu0 0.0
    %204 = vmatpush1.msra.mxu0 0.0
    %205 = vmatprep.subr.mxu0 0.0
    %206 = vmatpush1.msra.mxu0 0.0
    %207 = vmatprep.subr.mxu0 0.0
    %208 = vmatpush1.msra.mxu0 0.0
    %209 = vmatprep.subr.mxu0 0.0
    %210 = vmatpush1.msra.mxu0 0.0
    %211 = vmatprep.mubr.f32.mxu0 0.0
    %212 = vmatmul.mubr.f32.gmra.mrb[0].mxu0 %v142
    %v213 = vpop.f32.mrb[0].mxu0
    %v214 = vadd.f32 0.0, %v213
    %v215 = vpop.f32.mrb[0].mxu0
    %216 = vmatprep.mubr.f32.mxu0 0.0
    %217 = vmatmul.mubr.f32.gmra.mrb[0].mxu0 %v145
    %v218 = vpop.f32.mrb[0].mxu0
    %v219 = vadd.f32 0.0, %v218
    %v220 = vpop.f32.mrb[0].mxu0
    %221 = vdwg.mxu0
    %v222 = vld [vmem:[%s2] sm:$0xff]
    %v223 = vld [vmem:[%s2 + $0x8] sm:$0xff]
    %v224 = vld [vmem:[%s2 + $0x10] sm:$0xff]
    %v225 = vld [vmem:[%s2 + $0x18] sm:$0xff]
    %v226 = vld [vmem:[#allocation7] sm:$0xf]
    %vm227 = vcmask 261120
    %v229 = vsel %vm227, %v226, 0
    %v232 = vsel %vm227, %v214, 0
    %v235 = vsel %vm227, %v219, 0
    %237 = vmatprep.subr.mxu0 0.0
    %238 = vmatpush1.xpose.msra.mxu0 %v232
    %239 = vmatprep.subr.mxu0 0.0
    %240 = vmatpush1.xpose.msra.mxu0 %v235
    %241 = vmatprep.subr.mxu0 0.0
    %242 = vmatpush1.xpose.msra.mxu0 0.0
    %243 = vmatprep.subr.mxu0 0.0
    %244 = vmatpush1.xpose.msra.mxu0 0.0
    %245 = vmatprep.subr.mxu0 0.0
    %246 = vmatpush1.xpose.msra.mxu0 0.0
    %247 = vmatprep.subr.mxu0 0.0
    %248 = vmatpush1.xpose.msra.mxu0 0.0
    %249 = vmatprep.subr.mxu0 0.0
    %250 = vmatpush1.xpose.msra.mxu0 0.0
    %251 = vmatprep.subr.mxu0 0.0
    %252 = vmatpush1.xpose.msra.mxu0 0.0
    %253 = vmatprep.subr.mxu0 0.0
    %254 = vmatpush1.xpose.msra.mxu0 0.0
    %255 = vmatprep.subr.mxu0 0.0
    %256 = vmatpush1.xpose.msra.mxu0 0.0
    %257 = vmatprep.subr.mxu0 0.0
    %258 = vmatpush1.xpose.msra.mxu0 0.0
    %259 = vmatprep.subr.mxu0 0.0
    %260 = vmatpush1.xpose.msra.mxu0 0.0
    %261 = vmatprep.subr.mxu0 0.0
    %262 = vmatpush1.xpose.msra.mxu0 0.0
    %263 = vmatprep.subr.mxu0 0.0
    %264 = vmatpush1.xpose.msra.mxu0 0.0
    %265 = vmatprep.subr.mxu0 0.0
    %266 = vmatpush1.xpose.msra.mxu0 0.0
    %267 = vmatprep.subr.mxu0 0.0
    %268 = vmatpush1.xpose.msra.mxu0 0.0
    %269 = vmatprep.subr.mxu0 0.0
    %270 = vmatpush1.xpose.msra.mxu0 0.0
    %271 = vmatprep.subr.mxu0 0.0
    %272 = vmatpush1.xpose.msra.mxu0 0.0
    %273 = vmatprep.subr.mxu0 0.0
    %274 = vmatpush1.xpose.msra.mxu0 0.0
    %275 = vmatprep.subr.mxu0 0.0
    %276 = vmatpush1.xpose.msra.mxu0 0.0
    %277 = vmatprep.subr.mxu0 0.0
    %278 = vmatpush1.xpose.msra.mxu0 0.0
    %279 = vmatprep.subr.mxu0 0.0
    %280 = vmatpush1.xpose.msra.mxu0 0.0
    %281 = vmatprep.subr.mxu0 0.0
    %282 = vmatpush1.xpose.msra.mxu0 0.0
    %283 = vmatprep.subr.mxu0 0.0
    %284 = vmatpush1.xpose.msra.mxu0 0.0
    %285 = vmatprep.subr.mxu0 0.0
    %286 = vmatpush1.xpose.msra.mxu0 0.0
    %287 = vmatprep.subr.mxu0 0.0
    %288 = vmatpush1.xpose.msra.mxu0 0.0
    %289 = vmatprep.subr.mxu0 0.0
    %290 = vmatpush1.xpose.msra.mxu0 0.0
    %291 = vmatprep.subr.mxu0 0.0
    %292 = vmatpush1.xpose.msra.mxu0 0.0
    %293 = vmatprep.subr.mxu0 0.0
    %294 = vmatpush1.xpose.msra.mxu0 0.0
    %295 = vmatprep.subr.mxu0 0.0
    %296 = vmatpush1.xpose.msra.mxu0 0.0
    %297 = vmatprep.subr.mxu0 0.0
    %298 = vmatpush1.xpose.msra.mxu0 0.0
    %299 = vmatprep.subr.mxu0 0.0
    %300 = vmatpush1.xpose.msra.mxu0 0.0
    %301 = vmatprep.mubr.f32.mxu0 0.0
    %302 = vmatmul.mubr.f32.gmra.mrb[0].mxu0 %v229
    %v303 = vpop.f32.mrb[0].mxu0
    %v304 = vadd.f32 0.0, %v303
    %v305 = vpop.f32.mrb[0].mxu0
    %306 = vdwg.mxu0
    %v307 = vld [vmem:[#allocation8] sm:$0xff]
    %v308 = vld [vmem:[#allocation8 + $0x8] sm:$0xff]
    %v310 = vsel %vm140, %v304, 0
    %312 = vmatprep.subr.mxu0 0.0
    %313 = vmatpush1.msra.mxu0 %v307
    %314 = vmatprep.subr.mxu0 0.0
    %315 = vmatpush1.msra.mxu0 %v308
    %316 = vmatprep.subr.mxu0 0.0
    %317 = vmatpush1.msra.mxu0 0.0
    %318 = vmatprep.subr.mxu0 0.0
    %319 = vmatpush1.msra.mxu0 0.0
    %320 = vmatprep.subr.mxu0 0.0
    %321 = vmatpush1.msra.mxu0 0.0
    %322 = vmatprep.subr.mxu0 0.0
    %323 = vmatpush1.msra.mxu0 0.0
    %324 = vmatprep.subr.mxu0 0.0
    %325 = vmatpush1.msra.mxu0 0.0
    %326 = vmatprep.subr.mxu0 0.0
    %327 = vmatpush1.msra.mxu0 0.0
    %328 = vmatprep.subr.mxu0 0.0
    %329 = vmatpush1.msra.mxu0 0.0
    %330 = vmatprep.subr.mxu0 0.0
    %331 = vmatpush1.msra.mxu0 0.0
    %332 = vmatprep.subr.mxu0 0.0
    %333 = vmatpush1.msra.mxu0 0.0
    %334 = vmatprep.subr.mxu0 0.0
    %335 = vmatpush1.msra.mxu0 0.0
    %336 = vmatprep.subr.mxu0 0.0
    %337 = vmatpush1.msra.mxu0 0.0
    %338 = vmatprep.subr.mxu0 0.0
    %339 = vmatpush1.msra.mxu0 0.0
    %340 = vmatprep.subr.mxu0 0.0
    %341 = vmatpush1.msra.mxu0 0.0
    %342 = vmatprep.subr.mxu0 0.0
    %343 = vmatpush1.msra.mxu0 0.0
    %344 = vmatprep.subr.mxu0 0.0
    %345 = vmatpush1.msra.mxu0 0.0
    %346 = vmatprep.subr.mxu0 0.0
    %347 = vmatpush1.msra.mxu0 0.0
    %348 = vmatprep.subr.mxu0 0.0
    %349 = vmatpush1.msra.mxu0 0.0
    %350 = vmatprep.subr.mxu0 0.0
    %351 = vmatpush1.msra.mxu0 0.0
    %352 = vmatprep.subr.mxu0 0.0
    %353 = vmatpush1.msra.mxu0 0.0
    %354 = vmatprep.subr.mxu0 0.0
    %355 = vmatpush1.msra.mxu0 0.0
    %356 = vmatprep.subr.mxu0 0.0
    %357 = vmatpush1.msra.mxu0 0.0
    %358 = vmatprep.subr.mxu0 0.0
    %359 = vmatpush1.msra.mxu0 0.0
    %360 = vmatprep.subr.mxu0 0.0
    %361 = vmatpush1.msra.mxu0 0.0
    %362 = vmatprep.subr.mxu0 0.0
    %363 = vmatpush1.msra.mxu0 0.0
    %364 = vmatprep.subr.mxu0 0.0
    %365 = vmatpush1.msra.mxu0 0.0
    %366 = vmatprep.subr.mxu0 0.0
    %367 = vmatpush1.msra.mxu0 0.0
    %368 = vmatprep.subr.mxu0 0.0
    %369 = vmatpush1.msra.mxu0 0.0
    %370 = vmatprep.subr.mxu0 0.0
    %371 = vmatpush1.msra.mxu0 0.0
    %372 = vmatprep.subr.mxu0 0.0
    %373 = vmatpush1.msra.mxu0 0.0
    %374 = vmatprep.subr.mxu0 0.0
    %375 = vmatpush1.msra.mxu0 0.0
    %376 = vmatprep.mubr.f32.mxu0 0.0
    %377 = vmatmul.mubr.f32.gmra.mrb[0].mxu0 %v310
    %v378 = vpop.f32.mrb[0].mxu0
    %v379 = vadd.f32 0.0, %v378
    %v380 = vpop.f32.mrb[0].mxu0
    %381 = vdwg.mxu0
    %v382 = vld [vmem:[#allocation10] sm:$0xf]
    %v383 = vmul.f32 %v379, %v382
    %vm384 = vcmask 519168
    %v385 = vsel %vm384, %v383, 0.0
    %v386 = vrot.slane %v385, 4
    %v387 = vadd.f32 %v385, %v386
    %v388 = vrot.slane %v387, 2
    %v389 = vadd.f32 %v387, %v388
    %v390 = vrot.slane %v389, 1
    %v391 = vadd.f32 %v389, %v390
    %392 = vmatprep.subr.mxu0 0.0
    %393 = vmatpush1.msra.mxu0 %v222
    %394 = vmatprep.subr.mxu0 0.0
    %395 = vmatpush1.msra.mxu0 %v223
    %396 = vmatprep.subr.mxu0 0.0
    %397 = vmatpush1.msra.mxu0 %v224
    %398 = vmatprep.subr.mxu0 0.0
    %399 = vmatpush1.msra.mxu0 %v225
    %400 = vmatprep.subr.mxu0 0.0
    %401 = vmatpush1.msra.mxu0 0.0
    %402 = vmatprep.subr.mxu0 0.0
    %403 = vmatpush1.msra.mxu0 0.0
    %404 = vmatprep.subr.mxu0 0.0
    %405 = vmatpush1.msra.mxu0 0.0
    %406 = vmatprep.subr.mxu0 0.0
    %407 = vmatpush1.msra.mxu0 0.0
    %408 = vmatprep.subr.mxu0 0.0
    %409 = vmatpush1.msra.mxu0 0.0
    %410 = vmatprep.subr.mxu0 0.0
    %411 = vmatpush1.msra.mxu0 0.0
    %412 = vmatprep.subr.mxu0 0.0
    %413 = vmatpush1.msra.mxu0 0.0
    %414 = vmatprep.subr.mxu0 0.0
    %415 = vmatpush1.msra.mxu0 0.0
    %416 = vmatprep.subr.mxu0 0.0
    %417 = vmatpush1.msra.mxu0 0.0
    %418 = vmatprep.subr.mxu0 0.0
    %419 = vmatpush1.msra.mxu0 0.0
    %420 = vmatprep.subr.mxu0 0.0
    %421 = vmatpush1.msra.mxu0 0.0
    %422 = vmatprep.subr.mxu0 0.0
    %423 = vmatpush1.msra.mxu0 0.0
    %424 = vmatprep.subr.mxu0 0.0
    %425 = vmatpush1.msra.mxu0 0.0
    %426 = vmatprep.subr.mxu0 0.0
    %427 = vmatpush1.msra.mxu0 0.0
    %428 = vmatprep.subr.mxu0 0.0
    %429 = vmatpush1.msra.mxu0 0.0
    %430 = vmatprep.subr.mxu0 0.0
    %431 = vmatpush1.msra.mxu0 0.0
    %432 = vmatprep.subr.mxu0 0.0
    %433 = vmatpush1.msra.mxu0 0.0
    %434 = vmatprep.subr.mxu0 0.0
    %435 = vmatpush1.msra.mxu0 0.0
    %436 = vmatprep.subr.mxu0 0.0
    %437 = vmatpush1.msra.mxu0 0.0
    %438 = vmatprep.subr.mxu0 0.0
    %439 = vmatpush1.msra.mxu0 0.0
    %440 = vmatprep.subr.mxu0 0.0
    %441 = vmatpush1.msra.mxu0 0.0
    %442 = vmatprep.subr.mxu0 0.0
    %443 = vmatpush1.msra.mxu0 0.0
    %444 = vmatprep.subr.mxu0 0.0
    %445 = vmatpush1.msra.mxu0 0.0
    %446 = vmatprep.subr.mxu0 0.0
    %447 = vmatpush1.msra.mxu0 0.0
    %448 = vmatprep.subr.mxu0 0.0
    %449 = vmatpush1.msra.mxu0 0.0
    %450 = vmatprep.subr.mxu0 0.0
    %451 = vmatpush1.msra.mxu0 0.0
    %452 = vmatprep.subr.mxu0 0.0
    %453 = vmatpush1.msra.mxu0 0.0
    %454 = vmatprep.subr.mxu0 0.0
    %455 = vmatpush1.msra.mxu0 0.0
    %456 = vmatprep.mubr.f32.mxu0 0.0
    %457 = vmatmul.mubr.f32.gmra.mrb[0].mxu0 %v232
    %v458 = vpop.f32.mrb[0].mxu0
    %v459 = vadd.f32 %v391, %v458
    %v460 = vpop.f32.mrb[0].mxu0
    %461 = vmatprep.mubr.f32.mxu0 0.0
    %462 = vmatmul.mubr.f32.gmra.mrb[0].mxu0 %v235
    %v463 = vpop.f32.mrb[0].mxu0
    %v464 = vadd.f32 %v391, %v463
    %v465 = vpop.f32.mrb[0].mxu0
    %466 = vdwg.mxu0
    %vm467 = vcmp.gt.f32.partialorder %v459, 0.0
    %vm468 = vcmp.gt.f32.partialorder %v464, 0.0
    %v469 = vmul.f32 %v459, 0.2
    %v470 = vmul.f32 %v464, 0.2
    %v471 = vsel %vm467, %v459, %v469
    %v472 = vsel %vm468, %v464, %v470
    %v473 = vld [vmem:[#allocation11] sm:$0xff]
    %v474 = vld [vmem:[#allocation11 + $0x8] sm:$0xff]
    %v475 = vadd.f32 %v471, %v473
    %v476 = vadd.f32 %v472, %v474
    %vm477 = vcmask 523264
    %v478 = vsel %vm477, %v475, -inf
    %479 = vmax.xlane.f32.xlu0 %v478
    %v480 = vpop.xlane.xlu0 %479
    %v481 = vsel %vm477, %v476, -inf
    %482 = vmax.xlane.f32.xlu0 %v481
    %v483 = vpop.xlane.xlu0 %482
    %v484 = vsub.f32 %v475, %v480
    %v485 = vsub.f32 %v476, %v483
    %v486 = vmul.f32 %v484, 1.442695
    %v487 = vpow.pop %v486
    %v488 = vmul.f32 %v485, 1.442695
    %v489 = vpow.pop %v488
    %v490 = vld [vmem:[%s7] sm:$0xff]
    %v491 = vld [vmem:[%s7 + $0x8] sm:$0xff]
    %v492 = vld [vmem:[%s7 + $0x10] sm:$0xff]
    %v493 = vld [vmem:[%s7 + $0x18] sm:$0xff]
    %v494 = vld [vmem:[%s7 + $0x20] sm:$0xff]
    %v495 = vld [vmem:[%s7 + $0x28] sm:$0xff]
    %v496 = vld [vmem:[%s7 + $0x30] sm:$0xff]
    %v497 = vld [vmem:[%s7 + $0x38] sm:$0xff]
    %v499 = vsel %vm477, %v487, 0
    %v502 = vsel %vm477, %v489, 0
    %504 = vmatprep.subr.mxu0 0.0
    %505 = vmatpush1.msra.mxu0 %v490
    %506 = vmatprep.subr.mxu0 0.0
    %507 = vmatpush1.msra.mxu0 %v491
    %508 = vmatprep.subr.mxu0 0.0
    %509 = vmatpush1.msra.mxu0 %v492
    %510 = vmatprep.subr.mxu0 0.0
    %511 = vmatpush1.msra.mxu0 %v493
    %512 = vmatprep.subr.mxu0 0.0
    %513 = vmatpush1.msra.mxu0 %v494
    %514 = vmatprep.subr.mxu0 0.0
    %515 = vmatpush1.msra.mxu0 %v495
    %516 = vmatprep.subr.mxu0 0.0
    %517 = vmatpush1.msra.mxu0 %v496
    %518 = vmatprep.subr.mxu0 0.0
    %519 = vmatpush1.msra.mxu0 %v497
    %520 = vmatprep.subr.mxu0 0.0
    %521 = vmatpush1.msra.mxu0 0.0
    %522 = vmatprep.subr.mxu0 0.0
    %523 = vmatpush1.msra.mxu0 0.0
    %524 = vmatprep.subr.mxu0 0.0
    %525 = vmatpush1.msra.mxu0 0.0
    %526 = vmatprep.subr.mxu0 0.0
    %527 = vmatpush1.msra.mxu0 0.0
    %528 = vmatprep.subr.mxu0 0.0
    %529 = vmatpush1.msra.mxu0 0.0
    %530 = vmatprep.subr.mxu0 0.0
    %531 = vmatpush1.msra.mxu0 0.0
    %532 = vmatprep.subr.mxu0 0.0
    %533 = vmatpush1.msra.mxu0 0.0
    %534 = vmatprep.subr.mxu0 0.0
    %535 = vmatpush1.msra.mxu0 0.0
    %536 = vmatprep.subr.mxu0 0.0
    %537 = vmatpush1.msra.mxu0 0.0
    %538 = vmatprep.subr.mxu0 0.0
    %539 = vmatpush1.msra.mxu0 0.0
    %540 = vmatprep.subr.mxu0 0.0
    %541 = vmatpush1.msra.mxu0 0.0
    %542 = vmatprep.subr.mxu0 0.0
    %543 = vmatpush1.msra.mxu0 0.0
    %544 = vmatprep.subr.mxu0 0.0
    %545 = vmatpush1.msra.mxu0 0.0
    %546 = vmatprep.subr.mxu0 0.0
    %547 = vmatpush1.msra.mxu0 0.0
    %548 = vmatprep.subr.mxu0 0.0
    %549 = vmatpush1.msra.mxu0 0.0
    %550 = vmatprep.subr.mxu0 0.0
    %551 = vmatpush1.msra.mxu0 0.0
    %552 = vmatprep.subr.mxu0 0.0
    %553 = vmatpush1.msra.mxu0 0.0
    %554 = vmatprep.subr.mxu0 0.0
    %555 = vmatpush1.msra.mxu0 0.0
    %556 = vmatprep.subr.mxu0 0.0
    %557 = vmatpush1.msra.mxu0 0.0
    %558 = vmatprep.subr.mxu0 0.0
    %559 = vmatpush1.msra.mxu0 0.0
    %560 = vmatprep.subr.mxu0 0.0
    %561 = vmatpush1.msra.mxu0 0.0
    %562 = vmatprep.subr.mxu0 0.0
    %563 = vmatpush1.msra.mxu0 0.0
    %564 = vmatprep.subr.mxu0 0.0
    %565 = vmatpush1.msra.mxu0 0.0
    %566 = vmatprep.subr.mxu0 0.0
    %567 = vmatpush1.msra.mxu0 0.0
    %568 = vmatprep.mubr.f32.mxu0 0.0
    %569 = vmatmul.mubr.f32.gmra.mrb[0].mxu0 %v499
    %v570 = vpop.f32.mrb[0].mxu0
    %v571 = vadd.f32 0.0, %v570
    %v572 = vpop.f32.mrb[0].mxu0
    %573 = vmatprep.mubr.f32.mxu0 0.0
    %574 = vmatmul.mubr.f32.gmra.mrb[0].mxu0 %v502
    %v575 = vpop.f32.mrb[0].mxu0
    %v576 = vadd.f32 0.0, %v575
    %v577 = vpop.f32.mrb[0].mxu0
    %578 = vdwg.mxu0
    %v579 = vrcp.pop %v571
    %v580 = vrcp.pop %v576
    %v581 = vmul.f32 %v487, %v579
    %v582 = vmul.f32 %v489, %v580
    %v583 = vld [vmem:[%s8] sm:$0xff]
    %v584 = vld [vmem:[%s8 + $0x8] sm:$0xff]
    %v585 = vld [vmem:[%s8 + $0x10] sm:$0xff]
    %v586 = vld [vmem:[%s8 + $0x18] sm:$0xff]
    %v587 = vld [vmem:[%s8 + $0x20] sm:$0xff]
    %v588 = vld [vmem:[%s8 + $0x28] sm:$0xff]
    %v589 = vld [vmem:[%s8 + $0x30] sm:$0xff]
    %v590 = vld [vmem:[%s8 + $0x38] sm:$0xff]
    %v591 = vmul.f32 %v214, %v583
    %v592 = vmul.f32 %v219, %v584
    %v593 = vmul.f32 %v214, %v585
    %v594 = vmul.f32 %v219, %v586
    %v595 = vmul.f32 %v214, %v587
    %v596 = vmul.f32 %v219, %v588
    %v597 = vmul.f32 %v214, %v589
    %v598 = vmul.f32 %v219, %v590
    %v600 = vsel %vm477, %v581, 0
    %v603 = vsel %vm477, %v582, 0
    %605 = vmatprep.subr.mxu0 0.0
    %606 = vmatpush1.msra.mxu0 %v591
    %607 = vmatprep.subr.mxu0 0.0
    %608 = vmatpush1.msra.mxu0 %v592
    %609 = vmatprep.subr.mxu0 0.0
    %610 = vmatpush1.msra.mxu0 %v593
    %611 = vmatprep.subr.mxu0 0.0
    %612 = vmatpush1.msra.mxu0 %v594
    %613 = vmatprep.subr.mxu0 0.0
    %614 = vmatpush1.msra.mxu0 %v595
    %615 = vmatprep.subr.mxu0 0.0
    %616 = vmatpush1.msra.mxu0 %v596
    %617 = vmatprep.subr.mxu0 0.0
    %618 = vmatpush1.msra.mxu0 %v597
    %619 = vmatprep.subr.mxu0 0.0
    %620 = vmatpush1.msra.mxu0 %v598
    %621 = vmatprep.subr.mxu0 0.0
    %622 = vmatpush1.msra.mxu0 0.0
    %623 = vmatprep.subr.mxu0 0.0
    %624 = vmatpush1.msra.mxu0 0.0
    %625 = vmatprep.subr.mxu0 0.0
    %626 = vmatpush1.msra.mxu0 0.0
    %627 = vmatprep.subr.mxu0 0.0
    %628 = vmatpush1.msra.mxu0 0.0
    %629 = vmatprep.subr.mxu0 0.0
    %630 = vmatpush1.msra.mxu0 0.0
    %631 = vmatprep.subr.mxu0 0.0
    %632 = vmatpush1.msra.mxu0 0.0
    %633 = vmatprep.subr.mxu0 0.0
    %634 = vmatpush1.msra.mxu0 0.0
    %635 = vmatprep.subr.mxu0 0.0
    %636 = vmatpush1.msra.mxu0 0.0
    %637 = vmatprep.subr.mxu0 0.0
    %638 = vmatpush1.msra.mxu0 0.0
    %639 = vmatprep.subr.mxu0 0.0
    %640 = vmatpush1.msra.mxu0 0.0
    %641 = vmatprep.subr.mxu0 0.0
    %642 = vmatpush1.msra.mxu0 0.0
    %643 = vmatprep.subr.mxu0 0.0
    %644 = vmatpush1.msra.mxu0 0.0
    %645 = vmatprep.subr.mxu0 0.0
    %646 = vmatpush1.msra.mxu0 0.0
    %647 = vmatprep.subr.mxu0 0.0
    %648 = vmatpush1.msra.mxu0 0.0
    %649 = vmatprep.subr.mxu0 0.0
    %650 = vmatpush1.msra.mxu0 0.0
    %651 = vmatprep.subr.mxu0 0.0
    %652 = vmatpush1.msra.mxu0 0.0
    %653 = vmatprep.subr.mxu0 0.0
    %654 = vmatpush1.msra.mxu0 0.0
    %655 = vmatprep.subr.mxu0 0.0
    %656 = vmatpush1.msra.mxu0 0.0
    %657 = vmatprep.subr.mxu0 0.0
    %658 = vmatpush1.msra.mxu0 0.0
    %659 = vmatprep.subr.mxu0 0.0
    %660 = vmatpush1.msra.mxu0 0.0
    %661 = vmatprep.subr.mxu0 0.0
    %662 = vmatpush1.msra.mxu0 0.0
    %663 = vmatprep.subr.mxu0 0.0
    %664 = vmatpush1.msra.mxu0 0.0
    %665 = vmatprep.subr.mxu0 0.0
    %666 = vmatpush1.msra.mxu0 0.0
    %667 = vmatprep.subr.mxu0 0.0
    %668 = vmatpush1.msra.mxu0 0.0
    %669 = vmatprep.mubr.f32.mxu0 0.0
    %670 = vmatmul.mubr.f32.gmra.mrb[0].mxu0 %v600
    %v671 = vpop.f32.mrb[0].mxu0
    %v672 = vadd.f32 0.0, %v671
    %v673 = vpop.f32.mrb[0].mxu0
    %674 = vmatprep.mubr.f32.mxu0 0.0
    %675 = vmatmul.mubr.f32.gmra.mrb[0].mxu0 %v603
    %v676 = vpop.f32.mrb[0].mxu0
    %v677 = vadd.f32 0.0, %v676
    %v678 = vpop.f32.mrb[0].mxu0
    %679 = vdwg.mxu0
    %vm680 = vcmp.gt.f32.partialorder %v672, 0.0
    %vm681 = vcmp.gt.f32.partialorder %v677, 0.0
    %v682 = vmin.f32 %v672, 0.0
    %v683 = vmin.f32 %v677, 0.0
    %v684 = vmul.f32 %v682, 1.442695
    %v685 = vpow.pop %v684
    %v686 = vmul.f32 %v683, 1.442695
    %v687 = vpow.pop %v686
    %v688 = vsub.f32 %v685, 1.0
    %v689 = vsub.f32 %v687, 1.0
    %v690 = vsel %vm680, %v672, %v688
    %v691 = vsel %vm681, %v677, %v689
    %v692 = vld [vmem:[%s10] sm:$0xff]
    %v693 = vld [vmem:[%s10 + $0x8] sm:$0xff]
    %v694 = vld [vmem:[%s10 + $0x10] sm:$0xff]
    %v695 = vld [vmem:[%s10 + $0x18] sm:$0xff]
    %v697 = vsel %vm227, %v690, 0
    %v700 = vsel %vm227, %v691, 0
    %702 = vmatprep.subr.mxu0 0.0
    %703 = vmatpush1.msra.mxu0 %v692
    %704 = vmatprep.subr.mxu0 0.0
    %705 = vmatpush1.msra.mxu0 %v693
    %706 = vmatprep.subr.mxu0 0.0
    %707 = vmatpush1.msra.mxu0 %v694
    %708 = vmatprep.subr.mxu0 0.0
    %709 = vmatpush1.msra.mxu0 %v695
    %710 = vmatprep.subr.mxu0 0.0
    %711 = vmatpush1.msra.mxu0 0.0
    %712 = vmatprep.subr.mxu0 0.0
    %713 = vmatpush1.msra.mxu0 0.0
    %714 = vmatprep.subr.mxu0 0.0
    %715 = vmatpush1.msra.mxu0 0.0
    %716 = vmatprep.subr.mxu0 0.0
    %717 = vmatpush1.msra.mxu0 0.0
    %718 = vmatprep.subr.mxu0 0.0
    %719 = vmatpush1.msra.mxu0 0.0
    %720 = vmatprep.subr.mxu0 0.0
    %721 = vmatpush1.msra.mxu0 0.0
    %722 = vmatprep.subr.mxu0 0.0
    %723 = vmatpush1.msra.mxu0 0.0
    %724 = vmatprep.subr.mxu0 0.0
    %725 = vmatpush1.msra.mxu0 0.0
    %726 = vmatprep.subr.mxu0 0.0
    %727 = vmatpush1.msra.mxu0 0.0
    %728 = vmatprep.subr.mxu0 0.0
    %729 = vmatpush1.msra.mxu0 0.0
    %730 = vmatprep.subr.mxu0 0.0
    %731 = vmatpush1.msra.mxu0 0.0
    %732 = vmatprep.subr.mxu0 0.0
    %733 = vmatpush1.msra.mxu0 0.0
    %734 = vmatprep.subr.mxu0 0.0
    %735 = vmatpush1.msra.mxu0 0.0
    %736 = vmatprep.subr.mxu0 0.0
    %737 = vmatpush1.msra.mxu0 0.0
    %738 = vmatprep.subr.mxu0 0.0
    %739 = vmatpush1.msra.mxu0 0.0
    %740 = vmatprep.subr.mxu0 0.0
    %741 = vmatpush1.msra.mxu0 0.0
    %742 = vmatprep.subr.mxu0 0.0
    %743 = vmatpush1.msra.mxu0 0.0
    %744 = vmatprep.subr.mxu0 0.0
    %745 = vmatpush1.msra.mxu0 0.0
    %746 = vmatprep.subr.mxu0 0.0
    %747 = vmatpush1.msra.mxu0 0.0
    %748 = vmatprep.subr.mxu0 0.0
    %749 = vmatpush1.msra.mxu0 0.0
    %750 = vmatprep.subr.mxu0 0.0
    %751 = vmatpush1.msra.mxu0 0.0
    %752 = vmatprep.subr.mxu0 0.0
    %753 = vmatpush1.msra.mxu0 0.0
    %754 = vmatprep.subr.mxu0 0.0
    %755 = vmatpush1.msra.mxu0 0.0
    %756 = vmatprep.subr.mxu0 0.0
    %757 = vmatpush1.msra.mxu0 0.0
    %758 = vmatprep.subr.mxu0 0.0
    %759 = vmatpush1.msra.mxu0 0.0
    %760 = vmatprep.subr.mxu0 0.0
    %761 = vmatpush1.msra.mxu0 0.0
    %762 = vmatprep.subr.mxu0 0.0
    %763 = vmatpush1.msra.mxu0 0.0
    %764 = vmatprep.subr.mxu0 0.0
    %765 = vmatpush1.msra.mxu0 0.0
    %766 = vmatprep.mubr.f32.mxu0 0.0
    %767 = vmatmul.mubr.f32.gmra.mrb[0].mxu0 %v697
    %v768 = vpop.f32.mrb[0].mxu0
    %v769 = vadd.f32 0.0, %v768
    %v770 = vpop.f32.mrb[0].mxu0
    %771 = vmatprep.mubr.f32.mxu0 0.0
    %772 = vmatmul.mubr.f32.gmra.mrb[0].mxu0 %v700
    %v773 = vpop.f32.mrb[0].mxu0
    %v774 = vadd.f32 0.0, %v773
    %v775 = vpop.f32.mrb[0].mxu0
    %776 = vdwg.mxu0
    %v777 = vld [vmem:[%s11] sm:$0x1]
    %v779 = vlaneseq
    %v780 = vshrl.u32 %v779, 7
    %v781 = vsub.s32 0, %v780
    %v782 = vrot.slane %v777, %v781
    %v784 = vmul.f32 %v769, %v782
    %v785 = vmul.f32 %v774, %v782
    %786 = vadd.xlane.f32.xlu0 %v784
    %v787 = vpop.xlane.xlu0 %786
    %788 = vadd.xlane.f32.xlu0 %v785
    %v789 = vpop.xlane.xlu0 %788
    %v790 = vld [vmem:[%s12] sm:$0x1]
    %791 = vmatprep.subr.mxu0 0.0
    %792 = vmatpush1.xpose.msra.mxu0 %v769
    %793 = vmatprep.subr.mxu0 0.0
    %794 = vmatpush1.xpose.msra.mxu0 %v774
    %795 = vmatprep.subr.mxu0 0.0
    %796 = vmatpush1.xpose.msra.mxu0 0.0
    %797 = vmatprep.subr.mxu0 0.0
    %798 = vmatpush1.xpose.msra.mxu0 0.0
    %799 = vmatprep.subr.mxu0 0.0
    %800 = vmatpush1.xpose.msra.mxu0 0.0
    %801 = vmatprep.subr.mxu0 0.0
    %802 = vmatpush1.xpose.msra.mxu0 0.0
    %803 = vmatprep.subr.mxu0 0.0
    %804 = vmatpush1.xpose.msra.mxu0 0.0
    %805 = vmatprep.subr.mxu0 0.0
    %806 = vmatpush1.xpose.msra.mxu0 0.0
    %807 = vmatprep.subr.mxu0 0.0
    %808 = vmatpush1.xpose.msra.mxu0 0.0
    %809 = vmatprep.subr.mxu0 0.0
    %810 = vmatpush1.xpose.msra.mxu0 0.0
    %811 = vmatprep.subr.mxu0 0.0
    %812 = vmatpush1.xpose.msra.mxu0 0.0
    %813 = vmatprep.subr.mxu0 0.0
    %814 = vmatpush1.xpose.msra.mxu0 0.0
    %815 = vmatprep.subr.mxu0 0.0
    %816 = vmatpush1.xpose.msra.mxu0 0.0
    %817 = vmatprep.subr.mxu0 0.0
    %818 = vmatpush1.xpose.msra.mxu0 0.0
    %819 = vmatprep.subr.mxu0 0.0
    %820 = vmatpush1.xpose.msra.mxu0 0.0
    %821 = vmatprep.subr.mxu0 0.0
    %822 = vmatpush1.xpose.msra.mxu0 0.0
    %823 = vmatprep.subr.mxu0 0.0
    %824 = vmatpush1.xpose.msra.mxu0 0.0
    %825 = vmatprep.subr.mxu0 0.0
    %826 = vmatpush1.xpose.msra.mxu0 0.0
    %827 = vmatprep.subr.mxu0 0.0
    %828 = vmatpush1.xpose.msra.mxu0 0.0
    %829 = vmatprep.subr.mxu0 0.0
    %830 = vmatpush1.xpose.msra.mxu0 0.0
    %831 = vmatprep.subr.mxu0 0.0
    %832 = vmatpush1.xpose.msra.mxu0 0.0
    %833 = vmatprep.subr.mxu0 0.0
    %834 = vmatpush1.xpose.msra.mxu0 0.0
    %835 = vmatprep.subr.mxu0 0.0
    %836 = vmatpush1.xpose.msra.mxu0 0.0
    %837 = vmatprep.subr.mxu0 0.0
    %838 = vmatpush1.xpose.msra.mxu0 0.0
    %839 = vmatprep.subr.mxu0 0.0
    %840 = vmatpush1.xpose.msra.mxu0 0.0
    %841 = vmatprep.subr.mxu0 0.0
    %842 = vmatpush1.xpose.msra.mxu0 0.0
    %843 = vmatprep.subr.mxu0 0.0
    %844 = vmatpush1.xpose.msra.mxu0 0.0
    %845 = vmatprep.subr.mxu0 0.0
    %846 = vmatpush1.xpose.msra.mxu0 0.0
    %847 = vmatprep.subr.mxu0 0.0
    %848 = vmatpush1.xpose.msra.mxu0 0.0
    %849 = vmatprep.subr.mxu0 0.0
    %850 = vmatpush1.xpose.msra.mxu0 0.0
    %851 = vmatprep.subr.mxu0 0.0
    %852 = vmatpush1.xpose.msra.mxu0 0.0
    %853 = vmatprep.subr.mxu0 0.0
    %854 = vmatpush1.xpose.msra.mxu0 0.0
    %855 = vmatprep.mubr.f32.mxu0 0.0
    %856 = vmatmul.mubr.f32.gmra.mrb[0].mxu0 %v790
    %v857 = vpop.f32.mrb[0].mxu0
    %v858 = vadd.f32 0.0, %v857
    %v859 = vpop.f32.mrb[0].mxu0
    %860 = vdwg.mxu0
    %v861 = vlaneseq
    %v862 = vshrl.u32 %v861, 7
    %v863 = vsub.s32 0, %v862
    %v864 = vrot.slane %v858, %v863
    %v865 = vadd.f32 %v787, %v864
    %v866 = vadd.f32 %v789, %v864
    %vm867 = vcmp.gt.f32.partialorder %v865, 0.0
    %vm868 = vcmp.gt.f32.partialorder %v866, 0.0
    %v869 = vmul.f32 %v865, 0.2
    %v870 = vmul.f32 %v866, 0.2
    %v871 = vsel %vm867, %v865, %v869
    %v872 = vsel %vm868, %v866, %v870
    %v873 = vld [vmem:[#allocation13] sm:$0xff]
    %v874 = vld [vmem:[#allocation13 + $0x8] sm:$0xff]
    %v875 = vadd.f32 %v871, %v873
    %v876 = vadd.f32 %v872, %v874
    %v877 = vsel %vm140, %v875, -inf
    %878 = vmax.xlane.f32.xlu0 %v877
    %v879 = vpop.xlane.xlu0 %878
    %v880 = vsel %vm140, %v876, -inf
    %881 = vmax.xlane.f32.xlu0 %v880
    %v882 = vpop.xlane.xlu0 %881
    %v883 = vsub.f32 %v875, %v879
    %v884 = vsub.f32 %v876, %v882
    %v885 = vmul.f32 %v883, 1.442695
    %v886 = vpow.pop %v885
    %v887 = vmul.f32 %v884, 1.442695
    %v888 = vpow.pop %v887
    %v889 = vsel %vm140, %v886, 0.0
    %890 = vadd.xlane.f32.xlu0 %v889
    %v891 = vpop.xlane.xlu0 %890
    %v892 = vsel %vm140, %v888, 0.0
    %893 = vadd.xlane.f32.xlu0 %v892
    %v894 = vpop.xlane.xlu0 %893
    %v895 = vrcp.pop %v891
    %v896 = vrcp.pop %v894
    %v897 = vmul.f32 %v886, %v895
    %v898 = vmul.f32 %v888, %v896
    %v900 = vsel %vm140, %v897, 0
    %v903 = vsel %vm140, %v898, 0
    %905 = vmatprep.subr.mxu0 0.0
    %906 = vmatpush1.msra.mxu0 %v769
    %907 = vmatprep.subr.mxu0 0.0
    %908 = vmatpush1.msra.mxu0 %v774
    %909 = vmatprep.subr.mxu0 0.0
    %910 = vmatpush1.msra.mxu0 0.0
    %911 = vmatprep.subr.mxu0 0.0
    %912 = vmatpush1.msra.mxu0 0.0
    %913 = vmatprep.subr.mxu0 0.0
    %914 = vmatpush1.msra.mxu0 0.0
    %915 = vmatprep.subr.mxu0 0.0
    %916 = vmatpush1.msra.mxu0 0.0
    %917 = vmatprep.subr.mxu0 0.0
    %918 = vmatpush1.msra.mxu0 0.0
    %919 = vmatprep.subr.mxu0 0.0
    %920 = vmatpush1.msra.mxu0 0.0
    %921 = vmatprep.subr.mxu0 0.0
    %922 = vmatpush1.msra.mxu0 0.0
    %923 = vmatprep.subr.mxu0 0.0
    %924 = vmatpush1.msra.mxu0 0.0
    %925 = vmatprep.subr.mxu0 0.0
    %926 = vmatpush1.msra.mxu0 0.0
    %927 = vmatprep.subr.mxu0 0.0
    %928 = vmatpush1.msra.mxu0 0.0
    %929 = vmatprep.subr.mxu0 0.0
    %930 = vmatpush1.msra.mxu0 0.0
    %931 = vmatprep.subr.mxu0 0.0
    %932 = vmatpush1.msra.mxu0 0.0
    %933 = vmatprep.subr.mxu0 0.0
    %934 = vmatpush1.msra.mxu0 0.0
    %935 = vmatprep.subr.mxu0 0.0
    %936 = vmatpush1.msra.mxu0 0.0
    %937 = vmatprep.subr.mxu0 0.0
    %938 = vmatpush1.msra.mxu0 0.0
    %939 = vmatprep.subr.mxu0 0.0
    %940 = vmatpush1.msra.mxu0 0.0
    %941 = vmatprep.subr.mxu0 0.0
    %942 = vmatpush1.msra.mxu0 0.0
    %943 = vmatprep.subr.mxu0 0.0
    %944 = vmatpush1.msra.mxu0 0.0
    %945 = vmatprep.subr.mxu0 0.0
    %946 = vmatpush1.msra.mxu0 0.0
    %947 = vmatprep.subr.mxu0 0.0
    %948 = vmatpush1.msra.mxu0 0.0
    %949 = vmatprep.subr.mxu0 0.0
    %950 = vmatpush1.msra.mxu0 0.0
    %951 = vmatprep.subr.mxu0 0.0
    %952 = vmatpush1.msra.mxu0 0.0
    %953 = vmatprep.subr.mxu0 0.0
    %954 = vmatpush1.msra.mxu0 0.0
    %955 = vmatprep.subr.mxu0 0.0
    %956 = vmatpush1.msra.mxu0 0.0
    %957 = vmatprep.subr.mxu0 0.0
    %958 = vmatpush1.msra.mxu0 0.0
    %959 = vmatprep.subr.mxu0 0.0
    %960 = vmatpush1.msra.mxu0 0.0
    %961 = vmatprep.subr.mxu0 0.0
    %962 = vmatpush1.msra.mxu0 0.0
    %963 = vmatprep.subr.mxu0 0.0
    %964 = vmatpush1.msra.mxu0 0.0
    %965 = vmatprep.subr.mxu0 0.0
    %966 = vmatpush1.msra.mxu0 0.0
    %967 = vmatprep.subr.mxu0 0.0
    %968 = vmatpush1.msra.mxu0 0.0
    %969 = vmatprep.mubr.f32.mxu0 0.0
    %970 = vmatmul.mubr.f32.gmra.mrb[0].mxu0 %v900
    %v971 = vpop.f32.mrb[0].mxu0
    %v972 = vadd.f32 0.0, %v971
    %v973 = vpop.f32.mrb[0].mxu0
    %974 = vmatprep.mubr.f32.mxu0 0.0
    %975 = vmatmul.mubr.f32.gmra.mrb[0].mxu0 %v903
    %v976 = vpop.f32.mrb[0].mxu0
    %v977 = vadd.f32 0.0, %v976
    %v978 = vpop.f32.mrb[0].mxu0
    %979 = vdwg.mxu0
    %980 = vst [vmem:[#allocation14] sm:$0xff] %v972
    %981 = vst [vmem:[#allocation14 + $0x8] sm:$0xff] %v977
    // Predicated region
    $region82: #{tpu_custom_call.1} parent=1 // pred_check
      _
    $region83: #{tpu_custom_call.1} parent=1 // pred_check_branch
      %983 = sbr.rel (0) target = $region85
    $region84: #{tpu_custom_call.1} parent=1 // pred_region
      %s985 = ssub.s32 256, 256
      %986 = vsyncadd [#allocation4], %s985
      %s987 = sshll.u32 [#allocation14], 4
      %s988 = int_to_ptr.vmem [resolvable:$true] %s987
      %993 = dma.vmem_to_hbm [thread:$0]  %s988, 256, %s13, [#allocation4], 128, 128, 8
    $region85: #{tpu_custom_call.1} parent=1 // pred_fallthru
      _
    // Predicated region
    $region86: #{tpu_custom_call.1} parent=1 // pred_check
      _
    $region87: #{tpu_custom_call.1} parent=1 // pred_check_branch
      %995 = sbr.rel (0) target = $region89
    $region88: #{tpu_custom_call.1} parent=1 // pred_region
      %996 = dma.done [#allocation4], 256
    $region89: #{tpu_custom_call.1} parent=1 // pred_fallthru
      _
    %997 = vsyncpa [#allocation3], 1
    %998 = vsyncpa [#allocation6], 1
    %999 = vsyncpa [#allocation9], 1
    %1000 = vsyncpa [#allocation12], 1
    %1001 = vsyncpa [#allocation4], 1

</llo_original>
